<compile_context>
chip_gen: v7x
topology: tpu7x:2x2x1
jax: 0.10.0
libtpu: 0.0.40
codegen_flags: <defaults>
</compile_context>

<pallas_src>
import functools

import jax
import jax.numpy as jnp
from jax.experimental import pallas as pl
from jax.experimental.pallas import tpu as pltpu


_S_CHUNK = 8  # sublane-sized pooling chunk


def classifier_kernel(data_ref, w1_ref, b1_ref, w2_ref, b2_ref, out_ref):
    # data_ref: (tile_b, S, D)    native dtype (f32 or bf16), unpadded D
    # w1_ref:   (D, D_pad)        bf16, VMEM-resident (constant index_map)
    # b1_ref:   (1, D_pad)        f32
    # w2_ref:   (D_pad, C_pad)    bf16
    # b2_ref:   (1, C_pad)        f32
    # out_ref:  (tile_b, C_pad)   f32 (lane-dense store)
    tile_b, S, D = data_ref.shape

    # --- stand-in encoder: mean pool over S with chunked f32 accumulation ---
    # Only a (tile_b, D) f32 accumulator is live; the full tile is never
    # upcast to f32.
    n_full = S // _S_CHUNK
    acc = jnp.zeros((tile_b, D), jnp.float32)
    if n_full > 0:
        def body(i, acc):
            s0 = pl.multiple_of(i * _S_CHUNK, _S_CHUNK)
            chunk = data_ref[:, pl.ds(s0, _S_CHUNK), :].astype(jnp.float32)
            return acc + jnp.sum(chunk, axis=1)
        acc = jax.lax.fori_loop(0, n_full, body, acc, unroll=(n_full <= 8))
    rem = S - n_full * _S_CHUNK
    if rem > 0:
        tail = data_ref[:, n_full * _S_CHUNK:, :].astype(jnp.float32)
        acc = acc + jnp.sum(tail, axis=1)
    pooled = acc * jnp.float32(1.0 / S)                       # (tile_b, D)

    # --- MLP: Linear -> ReLU -> Linear; bf16 MXU inputs, f32 accumulation ---
    h = jnp.dot(pooled.astype(jnp.bfloat16), w1_ref[...],
                preferred_element_type=jnp.float32) + b1_ref[...]
    h = jnp.maximum(h, 0.0)                                    # ReLU on VPU
    out = jnp.dot(h.astype(jnp.bfloat16), w2_ref[...],
                  preferred_element_type=jnp.float32) + b2_ref[...]
    out_ref[...] = out.astype(out_ref.dtype)


def _round_up(x, m):
    return ((x + m - 1) // m) * m


def _vmem_limit_bytes():
    """Generation-aware scoped-VMEM limit: ~96 MiB on 128 MiB parts
    (v5e/v6e), ~48 MiB on 64 MiB parts (v7x)."""
    cap = 64 * 1024 * 1024  # conservative default (v7x physical)
    try:
        info = pltpu.get_tpu_info()
        cap = int(getattr(info, "vmem_capacity_bytes", cap))
    except Exception:
        pass
    return min((cap * 3) // 4, 100 * 1024 * 1024)


def _pick_tile_b(B, S, D, C_pad, data_itemsize, weight_bytes, vmem_limit):
    """Largest batch tile fitting the scoped-VMEM budget.

    Budget accounts for double-buffered data & output tiles, the (default
    double-buffered) resident weights, and a little compiler-scratch headroom.
    """
    budget = vmem_limit - 2 * weight_bytes - (2 << 20)
    per_row = 2 * S * D * data_itemsize + 2 * C_pad * 4
    tile = max(budget // per_row, 1)
    tile = min(tile, B)
    if B >= 16:
        # Keep >= 2 grid steps so the "parallel" batch axis can use both
        # TensorCores on v7x (no effect on single-TC v5e/v6e).
        tile = min(tile, -(-B // 2))
    if tile >= 8:
        tile = (tile // 8) * 8        # sublane multiple -> unmasked stores
    elif B <= 8:
        tile = B                      # tiny batch: single full-batch block
    else:
        # TODO(synk): if even 8 rows exceed the budget (huge S*D), add an
        # "arbitrary" grid axis over S with an f32 scratch accumulator.
        tile = 8
    return tile


def prepare_mlp_params(w1, b1, w2, b2):
    """Pad MLP params to lane-dense (128-multiple) shapes and cast weights to
    bf16 ONCE, outside the per-forward path (hoisted per review)."""
    D = w1.shape[0]
    C = w2.shape[1]
    D_pad = _round_up(D, 128)
    C_pad = _round_up(C, 128)
    w1_p = jnp.pad(w1, ((0, 0), (0, D_pad - D))).astype(jnp.bfloat16)         # (D, D_pad)
    b1_p = jnp.pad(b1.reshape(1, -1).astype(jnp.float32),
                   ((0, 0), (0, D_pad - D)))                                   # (1, D_pad)
    w2_p = jnp.pad(w2, ((0, D_pad - D), (0, C_pad - C))).astype(jnp.bfloat16)  # (D_pad, C_pad)
    b2_p = jnp.pad(b2.reshape(1, -1).astype(jnp.float32),
                   ((0, 0), (0, C_pad - C)))                                   # (1, C_pad)
    return w1_p, b1_p, w2_p, b2_p


@functools.partial(jax.jit, static_argnames=("n_classes",))
def classifier_forward(data, w1_p, b1_p, w2_p, b2_p, *, n_classes):
    B, S, D = data.shape
    D_pad = w1_p.shape[1]
    C_pad = w2_p.shape[1]

    weight_bytes = (w1_p.size * 2 + w2_p.size * 2 +
                    b1_p.size * 4 + b2_p.size * 4)
    vmem_limit = _vmem_limit_bytes()
    tile_b = _pick_tile_b(B, S, D, C_pad, data.dtype.itemsize,
                          weight_bytes, vmem_limit)
    grid = (pl.cdiv(B, tile_b),)

    cost = pl.CostEstimate(
        flops=2 * B * (D * D_pad + D_pad * C_pad) + B * S * D,
        transcendentals=0,
        bytes_accessed=B * S * D * data.dtype.itemsize
        + weight_bytes + B * C_pad * 4,
    )

    out_padded = pl.pallas_call(
        classifier_kernel,
        out_shape=jax.ShapeDtypeStruct((B, C_pad), jnp.float32),
        grid=grid,
        in_specs=[
            pl.BlockSpec((tile_b, S, D), lambda i: (i, 0, 0)),   # data: tiled over B, unpadded
            pl.BlockSpec((D, D_pad), lambda i: (0, 0)),          # w1: VMEM-resident
            pl.BlockSpec((1, D_pad), lambda i: (0, 0)),          # b1: resident
            pl.BlockSpec((D_pad, C_pad), lambda i: (0, 0)),      # w2: resident
            pl.BlockSpec((1, C_pad), lambda i: (0, 0)),          # b2: resident
        ],
        out_specs=pl.BlockSpec((tile_b, C_pad), lambda i: (i, 0)),  # lane-dense store
        compiler_params=pltpu.CompilerParams(
            dimension_semantics=("parallel",),
            vmem_limit_bytes=int(vmem_limit),
        ),
        cost_estimate=cost,
    )(data, w1_p, b1_p, w2_p, b2_p)

    return out_padded[:, :n_classes]


if __name__ == "__main__":
    # Small shapes consistent with the module's forward.
    B, S, d_model, n_classes = 8, 8, 32, 8

    key = jax.random.PRNGKey(0)
    k_data, k_w1, k_b1, k_w2, k_b2 = jax.random.split(key, 5)

    # NOTE: bf16 `data` is also supported (halves HBM traffic; pooling still
    # accumulates in f32).  f32 is used here to match the Torch module.
    data = jax.random.normal(k_data, (B, S, d_model), dtype=jnp.float32)
    # Synthetic nn.Linear parameters, stored (in_features, out_features).
    w1 = jax.random.normal(k_w1, (d_model, d_model), dtype=jnp.float32) * 0.1
    b1 = jax.random.normal(k_b1, (d_model,), dtype=jnp.float32) * 0.1
    w2 = jax.random.normal(k_w2, (d_model, n_classes), dtype=jnp.float32) * 0.1
    b2 = jax.random.normal(k_b2, (n_classes,), dtype=jnp.float32) * 0.1

    params = prepare_mlp_params(w1, b1, w2, b2)   # once, outside forward path
    out = classifier_forward(data, *params, n_classes=n_classes)
    jax.block_until_ready(out)

    # Pure-JAX reference with the same bf16-MXU / f32-accumulate recipe.
    pooled = jnp.mean(data.astype(jnp.float32), axis=1)
    h = jnp.dot(pooled.astype(jnp.bfloat16), w1.astype(jnp.bfloat16),
                preferred_element_type=jnp.float32) + b1
    h = jnp.maximum(h, 0.0)
    ref = jnp.dot(h.astype(jnp.bfloat16), w2.astype(jnp.bfloat16),
                  preferred_element_type=jnp.float32) + b2

    assert out.shape == (B, n_classes)
    assert bool(jnp.allclose(out, ref, atol=2e-3, rtol=2e-3)), \
        f"max abs err = {jnp.max(jnp.abs(out - ref))}"

    print("KERNEL_OK")
</pallas_src>

<mosaic_0001>
module attributes {stable_mosaic.version = 11 : i64} {
  func.func @classifier_kernel(%arg0: i32, %arg1: memref<8x8x32xf32, #tpu.memory_space<vmem>>, %arg2: memref<32x128xbf16, #tpu.memory_space<vmem>>, %arg3: memref<1x128xf32, #tpu.memory_space<vmem>>, %arg4: memref<128x128xbf16, #tpu.memory_space<vmem>>, %arg5: memref<1x128xf32, #tpu.memory_space<vmem>>, %arg6: memref<8x128xf32, #tpu.memory_space<vmem>>) attributes {dimension_semantics = [#tpu.dimension_semantics<parallel>], iteration_bounds = array<i64: 1>, scalar_prefetch = 0 : i64, scratch_operands = 0 : i64, tpu.core_type = #tpu.core_type<tc>, window_params = [{transform_indices = @transform_0, window_bounds = array<i64: 8, 8, 32>}, {pipeline_mode = #tpu.pipeline_mode<synchronous>, transform_indices = @transform_1, window_bounds = array<i64: 32, 128>}, {pipeline_mode = #tpu.pipeline_mode<synchronous>, transform_indices = @transform_2, window_bounds = array<i64: 1, 128>}, {pipeline_mode = #tpu.pipeline_mode<synchronous>, transform_indices = @transform_3, window_bounds = array<i64: 128, 128>}, {pipeline_mode = #tpu.pipeline_mode<synchronous>, transform_indices = @transform_4, window_bounds = array<i64: 1, 128>}, {transform_indices = @transform_5, window_bounds = array<i64: 8, 128>}]} {
    %cst = arith.constant 0.000000e+00 : f32
    %0 = vector.broadcast %cst : f32 to vector<8x32xf32>
    %c0_i32 = arith.constant 0 : i32
    %c8_i32 = arith.constant 8 : i32
    %1 = arith.muli %c0_i32, %c8_i32 : i32
    %2 = tpu.assume_multiple %1, 8 : i32
    %c0 = arith.constant 0 : index
    %3 = arith.index_cast %2 : i32 to index
    %c0_0 = arith.constant 0 : index
    %4 = vector.load %arg1[%c0, %3, %c0_0] : memref<8x8x32xf32, #tpu.memory_space<vmem>>, vector<8x8x32xf32>
    %cst_1 = arith.constant dense<0.000000e+00> : vector<8x32xf32>
    %5 = vector.multi_reduction <add>, %4, %cst_1 [1] : vector<8x8x32xf32> to vector<8x32xf32>
    %6 = arith.addf %0, %5 : vector<8x32xf32>
    %c1_i32 = arith.constant 1 : i32
    %cst_2 = arith.constant 1.250000e-01 : f32
    %7 = vector.broadcast %cst_2 : f32 to vector<8x32xf32>
    %8 = arith.mulf %6, %7 : vector<8x32xf32>
    %9 = arith.truncf %8 : vector<8x32xf32> to vector<8x32xbf16>
    %c0_3 = arith.constant 0 : index
    %c0_4 = arith.constant 0 : index
    %10 = vector.load %arg2[%c0_3, %c0_4] : memref<32x128xbf16, #tpu.memory_space<vmem>>, vector<32x128xbf16>
    %cst_5 = arith.constant dense<0.000000e+00> : vector<8x128xf32>
    %11 = tpu.matmul %9, %10, %cst_5 {dimension_numbers = #tpu.dot_dimension_numbers<[1], [0], [0], [1], [0, 0, 1, 1], [], []>} : vector<8x32xbf16>, vector<32x128xbf16>, vector<8x128xf32> -> vector<8x128xf32>
    %c0_6 = arith.constant 0 : index
    %c0_7 = arith.constant 0 : index
    %12 = vector.load %arg3[%c0_6, %c0_7] : memref<1x128xf32, #tpu.memory_space<vmem>>, vector<1x128xf32>
    %13 = vector.broadcast %12 : vector<1x128xf32> to vector<8x128xf32>
    %14 = arith.addf %11, %13 : vector<8x128xf32>
    %cst_8 = arith.constant 0.000000e+00 : f32
    %15 = vector.broadcast %cst_8 : f32 to vector<8x128xf32>
    %16 = arith.maximumf %14, %15 : vector<8x128xf32>
    %17 = arith.truncf %16 : vector<8x128xf32> to vector<8x128xbf16>
    %c0_9 = arith.constant 0 : index
    %c0_10 = arith.constant 0 : index
    %18 = vector.load %arg4[%c0_9, %c0_10] : memref<128x128xbf16, #tpu.memory_space<vmem>>, vector<128x128xbf16>
    %cst_11 = arith.constant dense<0.000000e+00> : vector<8x128xf32>
    %19 = tpu.matmul %17, %18, %cst_11 {dimension_numbers = #tpu.dot_dimension_numbers<[1], [0], [0], [1], [0, 0, 1, 1], [], []>} : vector<8x128xbf16>, vector<128x128xbf16>, vector<8x128xf32> -> vector<8x128xf32>
    %c0_12 = arith.constant 0 : index
    %c0_13 = arith.constant 0 : index
    %20 = vector.load %arg5[%c0_12, %c0_13] : memref<1x128xf32, #tpu.memory_space<vmem>>, vector<1x128xf32>
    %21 = vector.broadcast %20 : vector<1x128xf32> to vector<8x128xf32>
    %22 = arith.addf %19, %21 : vector<8x128xf32>
    %c0_14 = arith.constant 0 : index
    %c0_15 = arith.constant 0 : index
    %23 = vector.load %arg6[%c0_14, %c0_15] : memref<8x128xf32, #tpu.memory_space<vmem>>, vector<8x128xf32>
    tpu.vector_store %arg6[%c0_14, %c0_15], %22 {strides = array<i32>} : memref<8x128xf32, #tpu.memory_space<vmem>>, vector<8x128xf32>,
    return
  }
  func.func @transform_0(%arg0: i32) -> (i32, i32, i32) {
    %c0_i32 = arith.constant 0 : i32
    %c0_i32_0 = arith.constant 0 : i32
    %c0_i32_1 = arith.constant 0 : i32
    return %arg0, %c0_i32, %c0_i32_0 : i32, i32, i32
  }
  func.func @transform_1(%arg0: i32) -> (i32, i32) {
    %c0_i32 = arith.constant 0 : i32
    %c0_i32_0 = arith.constant 0 : i32
    %c0_i32_1 = arith.constant 0 : i32
    return %c0_i32, %c0_i32_0 : i32, i32
  }
  func.func @transform_2(%arg0: i32) -> (i32, i32) {
    %c0_i32 = arith.constant 0 : i32
    %c0_i32_0 = arith.constant 0 : i32
    %c0_i32_1 = arith.constant 0 : i32
    return %c0_i32, %c0_i32_0 : i32, i32
  }
  func.func @transform_3(%arg0: i32) -> (i32, i32) {
    %c0_i32 = arith.constant 0 : i32
    %c0_i32_0 = arith.constant 0 : i32
    %c0_i32_1 = arith.constant 0 : i32
    return %c0_i32, %c0_i32_0 : i32, i32
  }
  func.func @transform_4(%arg0: i32) -> (i32, i32) {
    %c0_i32 = arith.constant 0 : i32
    %c0_i32_0 = arith.constant 0 : i32
    %c0_i32_1 = arith.constant 0 : i32
    return %c0_i32, %c0_i32_0 : i32, i32
  }
  func.func @transform_5(%arg0: i32) -> (i32, i32) {
    %c0_i32 = arith.constant 0 : i32
    %c0_i32_0 = arith.constant 0 : i32
    return %arg0, %c0_i32 : i32, i32
  }
}

</mosaic_0001>

<llo_original>
// kernel: classifier_forward.1
$region0: #{classifier_forward.1}
  #allocation0 [shape = 'u32[]', space=smem, size = 0x4, offset = 0x4, fixed_abs, tag = 'smem constant byte address 0x4 - core index']
  #allocation1 [shape = 'u32[144,128]{1,0:T(1,128)}', space=vmem, size = 0x12000, scoped, tag = 'internal scratch']
  %s0 = inlined_call_operand.hbm [shape: f32[8,8,32], index: 0, kind: input, shape index: {}]
  %s1 = inlined_call_operand.hbm [shape: bf16[32,128], index: 1, kind: input, shape index: {}]
  %s2 = inlined_call_operand.vmem [shape: f32[1,128], index: 2, kind: input, shape index: {}]
  %s3 = inlined_call_operand.hbm [shape: bf16[128,128], index: 3, kind: input, shape index: {}]
  %s4 = inlined_call_operand.vmem [shape: f32[1,128], index: 4, kind: input, shape index: {}]
  %s5 = inlined_call_operand.hbm [shape: f32[8,128], index: 5, kind: output, shape index: {}]
  %s6 = sld [smem:[#allocation0]]
  $region42: #{classifier_forward.1} parent=0
    _
  %s8 = ssub.s32 1, %s6
  %s9 = scalar_select 0, %s8, %s6
  $region1: #{classifier_forward.1} parent=0
    #allocation2 [shape = 'u8[32768]{0}', space=vmem, size = 0x8000, scoped, tag = 'input window, operand 0, single buffered']
    #allocation3 [shape = 's32[1]{0}', space=sflag, size = 0x4, scoped, tag = 'scoped memory for classifier_forward.1']
    #allocation4 [shape = 's32[1]{0}', space=sflag, size = 0x4, scoped, tag = 'scoped memory for classifier_forward.1']
    #allocation5 [shape = 'u8[8192]{0}', space=vmem, size = 0x2000, scoped, tag = 'input window, operand 1, single buffered']
    #allocation6 [shape = 's32[1]{0}', space=sflag, size = 0x4, scoped, tag = 'scoped memory for classifier_forward.1']
    #allocation7 [shape = 'u8[32768]{0}', space=vmem, size = 0x8000, scoped, tag = 'input window, operand 3, single buffered']
    #allocation8 [shape = 'u8[4096]{0}', space=vmem, size = 0x1000, scoped, tag = 'output window, operand 0, single buffered']
    %10 = vsyncpa [#allocation3], 0
    %11 = vsyncpa [#allocation6], 0
    %12 = vsyncpa [#allocation4], 0
    // Predicated region
    $region2: #{classifier_forward.1} parent=1 // pred_check
      _
    $region3: #{classifier_forward.1} parent=1 // pred_check_branch
      %14 = sbr.rel (0) target = $region5
    $region4: #{classifier_forward.1} parent=1 // pred_region
      %s16 = ssub.s32 1024, 1024
      %17 = vsyncadd [#allocation3], %s16
      %s18 = sshll.u32 [#allocation2], 4
      %s19 = int_to_ptr.vmem [resolvable:$true] %s18
      %24 = dma.hbm_to_vmem [thread:$0]  %s0, 1024, %s19, [#allocation3], 128, 128, 8
    $region5: #{classifier_forward.1} parent=1 // pred_fallthru
      _
    // Predicated region
    $region6: #{classifier_forward.1} parent=1 // pred_check
      _
    $region7: #{classifier_forward.1} parent=1 // pred_check_branch
      %26 = sbr.rel (0) target = $region9
    $region8: #{classifier_forward.1} parent=1 // pred_region
      %s28 = ssub.s32 256, 256
      %29 = vsyncadd [#allocation6], %s28
      %s30 = sshll.u32 [#allocation5], 4
      %s31 = int_to_ptr.vmem [resolvable:$true] %s30
      %36 = dma.hbm_to_vmem [thread:$0]  %s1, 256, %s31, [#allocation6], 64, 64, 4
    $region9: #{classifier_forward.1} parent=1 // pred_fallthru
      _
    // Predicated region
    $region10: #{classifier_forward.1} parent=1 // pred_check
      _
    $region11: #{classifier_forward.1} parent=1 // pred_check_branch
      %38 = sbr.rel (0) target = $region13
    $region12: #{classifier_forward.1} parent=1 // pred_region
      _
    $region13: #{classifier_forward.1} parent=1 // pred_fallthru
      _
    // Predicated region
    $region14: #{classifier_forward.1} parent=1 // pred_check
      _
    $region15: #{classifier_forward.1} parent=1 // pred_check_branch
      %40 = sbr.rel (0) target = $region17
    $region16: #{classifier_forward.1} parent=1 // pred_region
      %s42 = ssub.s32 1024, 1024
      %43 = vsyncadd [#allocation6], %s42
      %s44 = sshll.u32 [#allocation7], 4
      %s45 = int_to_ptr.vmem [resolvable:$true] %s44
      %50 = dma.hbm_to_vmem [thread:$0]  %s3, 1024, %s45, [#allocation6], 64, 64, 4
    $region17: #{classifier_forward.1} parent=1 // pred_fallthru
      _
    // Predicated region
    $region18: #{classifier_forward.1} parent=1 // pred_check
      _
    $region19: #{classifier_forward.1} parent=1 // pred_check_branch
      %52 = sbr.rel (0) target = $region21
    $region20: #{classifier_forward.1} parent=1 // pred_region
      _
    $region21: #{classifier_forward.1} parent=1 // pred_fallthru
      _
    // Predicated region
    $region22: #{classifier_forward.1} parent=1 // pred_check
      _
    $region23: #{classifier_forward.1} parent=1 // pred_check_branch
      %54 = sbr.rel (0) target = $region25
    $region24: #{classifier_forward.1} parent=1 // pred_region
      %55 = dma.done [#allocation3], 1024
    $region25: #{classifier_forward.1} parent=1 // pred_fallthru
      _
    // Predicated region
    $region26: #{classifier_forward.1} parent=1 // pred_check
      _
    $region27: #{classifier_forward.1} parent=1 // pred_check_branch
      %57 = sbr.rel (0) target = $region29
    $region28: #{classifier_forward.1} parent=1 // pred_region
      %58 = dma.done [#allocation6], 256
    $region29: #{classifier_forward.1} parent=1 // pred_fallthru
      _
    // Predicated region
    $region30: #{classifier_forward.1} parent=1 // pred_check
      _
    $region31: #{classifier_forward.1} parent=1 // pred_check_branch
      %60 = sbr.rel (0) target = $region33
    $region32: #{classifier_forward.1} parent=1 // pred_region
      %61 = dma.done [#allocation6], 1024
    $region33: #{classifier_forward.1} parent=1 // pred_fallthru
      _
    %v63 = vld [vmem:[#allocation2] sm:$0xff]
    %v64 = vld [vmem:[#allocation2 + $0x8] sm:$0xff]
    %v65 = vld [vmem:[#allocation2 + $0x10] sm:$0xff]
    %v66 = vld [vmem:[#allocation2 + $0x18] sm:$0xff]
    %v67 = vld [vmem:[#allocation2 + $0x20] sm:$0xff]
    %v68 = vld [vmem:[#allocation2 + $0x28] sm:$0xff]
    %v69 = vld [vmem:[#allocation2 + $0x30] sm:$0xff]
    %v70 = vld [vmem:[#allocation2 + $0x38] sm:$0xff]
    %vm71 = vcmask 261120
    %v72 = vsel %vm71, %v63, 0.0
    %v73 = vrot.slane %v72, 4
    %v74 = vadd.f32 %v72, %v73
    %v75 = vrot.slane %v74, 2
    %v76 = vadd.f32 %v74, %v75
    %v77 = vrot.slane %v76, 1
    %v78 = vadd.f32 %v76, %v77
    %v79 = vsel %vm71, %v64, 0.0
    %v80 = vrot.slane %v79, 4
    %v81 = vadd.f32 %v79, %v80
    %v82 = vrot.slane %v81, 2
    %v83 = vadd.f32 %v81, %v82
    %v84 = vrot.slane %v83, 1
    %v85 = vadd.f32 %v83, %v84
    %v86 = vsel %vm71, %v65, 0.0
    %v87 = vrot.slane %v86, 4
    %v88 = vadd.f32 %v86, %v87
    %v89 = vrot.slane %v88, 2
    %v90 = vadd.f32 %v88, %v89
    %v91 = vrot.slane %v90, 1
    %v92 = vadd.f32 %v90, %v91
    %v93 = vsel %vm71, %v66, 0.0
    %v94 = vrot.slane %v93, 4
    %v95 = vadd.f32 %v93, %v94
    %v96 = vrot.slane %v95, 2
    %v97 = vadd.f32 %v95, %v96
    %v98 = vrot.slane %v97, 1
    %v99 = vadd.f32 %v97, %v98
    %v100 = vsel %vm71, %v67, 0.0
    %v101 = vrot.slane %v100, 4
    %v102 = vadd.f32 %v100, %v101
    %v103 = vrot.slane %v102, 2
    %v104 = vadd.f32 %v102, %v103
    %v105 = vrot.slane %v104, 1
    %v106 = vadd.f32 %v104, %v105
    %v107 = vsel %vm71, %v68, 0.0
    %v108 = vrot.slane %v107, 4
    %v109 = vadd.f32 %v107, %v108
    %v110 = vrot.slane %v109, 2
    %v111 = vadd.f32 %v109, %v110
    %v112 = vrot.slane %v111, 1
    %v113 = vadd.f32 %v111, %v112
    %v114 = vsel %vm71, %v69, 0.0
    %v115 = vrot.slane %v114, 4
    %v116 = vadd.f32 %v114, %v115
    %v117 = vrot.slane %v116, 2
    %v118 = vadd.f32 %v116, %v117
    %v119 = vrot.slane %v118, 1
    %v120 = vadd.f32 %v118, %v119
    %v121 = vsel %vm71, %v70, 0.0
    %v122 = vrot.slane %v121, 4
    %v123 = vadd.f32 %v121, %v122
    %v124 = vrot.slane %v123, 2
    %v125 = vadd.f32 %v123, %v124
    %v126 = vrot.slane %v125, 1
    %v127 = vadd.f32 %v125, %v126
    %v128 = vadd.f32 %v78, 0.0
    %v129 = vadd.f32 %v85, 0.0
    %v130 = vadd.f32 %v92, 0.0
    %v131 = vadd.f32 %v99, 0.0
    %v132 = vadd.f32 %v106, 0.0
    %v133 = vadd.f32 %v113, 0.0
    %v134 = vadd.f32 %v120, 0.0
    %v135 = vadd.f32 %v127, 0.0
    %v136 = vmul.f32 %v128, 0.125
    %v137 = vmul.f32 %v129, 0.125
    %v138 = vmul.f32 %v130, 0.125
    %v139 = vmul.f32 %v131, 0.125
    %v140 = vmul.f32 %v132, 0.125
    %v141 = vmul.f32 %v133, 0.125
    %v142 = vmul.f32 %v134, 0.125
    %v143 = vmul.f32 %v135, 0.125
    %v144 = vpack.c.bf16 %v136, %v136
    %v145 = vpack.c.bf16 %v137, %v137
    %v146 = vpack.c.bf16 %v138, %v138
    %v147 = vpack.c.bf16 %v139, %v139
    %v148 = vpack.c.bf16 %v140, %v140
    %v149 = vpack.c.bf16 %v141, %v141
    %v150 = vpack.c.bf16 %v142, %v142
    %v151 = vpack.c.bf16 %v143, %v143
    %v152 = vld [vmem:[#allocation5] sm:$0xf]
    %v153 = vld [vmem:[#allocation5 + $0x4] sm:$0xf]
    %v154 = vld [vmem:[#allocation5 + $0x8] sm:$0xf]
    %v155 = vld [vmem:[#allocation5 + $0xc] sm:$0xf]
    %v156 = vld [vmem:[%s2] sm:$0x1]
    %v158 = vlaneseq
    %v159 = vshrl.u32 %v158, 7
    %v160 = vsub.s32 0, %v159
    %v161 = vrot.slane %v156, %v160
    %v171 = vunpack.c.l.b16 %v144
    %v172 = vunpack.c.l.b16 %v145
    %v173 = vunpack.c.l.b16 %v146
    %v174 = vunpack.c.l.b16 %v147
    %v175 = vunpack.c.l.b16 %v148
    %v176 = vunpack.c.l.b16 %v149
    %v177 = vunpack.c.l.b16 %v150
    %v178 = vunpack.c.l.b16 %v151
    %vm179 = vcmask 1041409
    %v180 = vsel %vm179, %v172, %v171
    %vm181 = vcmask 1042434
    %v182 = vsel %vm181, %v173, %v180
    %vm183 = vcmask 1043459
    %v184 = vsel %vm183, %v174, %v182
    %vm185 = vcmask 1044484
    %v186 = vsel %vm185, %v175, %v184
    %vm187 = vcmask 1045509
    %v188 = vsel %vm187, %v176, %v186
    %vm189 = vcmask 1046534
    %v190 = vsel %vm189, %v177, %v188
    %vm191 = vcmask 1047559
    %v192 = vsel %vm191, %v178, %v190
    %v193 = vpack.c.b16 %v192, %v192
    %v198 = vunpack.c.l.b16 %v152
    %v199 = vunpack.c.l.b16 %v153
    %v200 = vunpack.c.l.b16 %v154
    %v201 = vunpack.c.l.b16 %v155
    %v202 = vpack.c.b16 %v199, %v198
    %v203 = vpack.c.b16 %v201, %v200
    %v207 = vsel %vm71, %v193, 0
    %209 = vmatprep.subr.bf16.mxu0 0
    %210 = vmatpush1.bf16.msra.mxu0 %v202
    %211 = vmatprep.subr.bf16.mxu0 0
    %212 = vmatpush1.bf16.msra.mxu0 %v203
    %213 = vmatprep.subr.bf16.mxu0 0
    %214 = vmatpush1.bf16.msra.mxu0 0
    %215 = vmatprep.subr.bf16.mxu0 0
    %216 = vmatpush1.bf16.msra.mxu0 0
    %217 = vmatprep.subr.bf16.mxu0 0
    %218 = vmatpush1.bf16.msra.mxu0 0
    %219 = vmatprep.subr.bf16.mxu0 0
    %220 = vmatpush1.bf16.msra.mxu0 0
    %221 = vmatprep.subr.bf16.mxu0 0
    %222 = vmatpush1.bf16.msra.mxu0 0
    %223 = vmatprep.subr.bf16.mxu0 0
    %224 = vmatpush1.bf16.msra.mxu0 0
    %225 = vmatprep.subr.bf16.mxu0 0
    %226 = vmatpush1.bf16.msra.mxu0 0
    %227 = vmatprep.subr.bf16.mxu0 0
    %228 = vmatpush1.bf16.msra.mxu0 0
    %229 = vmatprep.subr.bf16.mxu0 0
    %230 = vmatpush1.bf16.msra.mxu0 0
    %231 = vmatprep.subr.bf16.mxu0 0
    %232 = vmatpush1.bf16.msra.mxu0 0
    %233 = vmatprep.subr.bf16.mxu0 0
    %234 = vmatpush1.bf16.msra.mxu0 0
    %235 = vmatprep.subr.bf16.mxu0 0
    %236 = vmatpush1.bf16.msra.mxu0 0
    %237 = vmatprep.subr.bf16.mxu0 0
    %238 = vmatpush1.bf16.msra.mxu0 0
    %239 = vmatprep.subr.bf16.mxu0 0
    %240 = vmatpush1.bf16.msra.mxu0 0
    %241 = vmatprep.mubr.bf16.mxu0 0
    %242 = vmatmul.mubr.bf16.gmra.mrb[0].mxu0 %v207
    %v243 = vpop.f32.mrb[0].mxu0
    %v244 = vadd.f32 %v161, %v243
    %v245 = vpop.f32.mrb[0].mxu0
    %v246 = vpop.f32.mrb[0].mxu0
    %v247 = vpop.f32.mrb[0].mxu0
    %248 = vdwg.mxu0
    %v249 = vmax.f32 %v244, 0.0
    %v250 = vpack.c.bf16 %v249, %v249
    %v251 = vld [vmem:[#allocation7] sm:$0xf]
    %v252 = vld [vmem:[#allocation7 + $0x4] sm:$0xf]
    %v253 = vld [vmem:[#allocation7 + $0x8] sm:$0xf]
    %v254 = vld [vmem:[#allocation7 + $0xc] sm:$0xf]
    %v255 = vld [vmem:[#allocation7 + $0x10] sm:$0xf]
    %v256 = vld [vmem:[#allocation7 + $0x14] sm:$0xf]
    %v257 = vld [vmem:[#allocation7 + $0x18] sm:$0xf]
    %v258 = vld [vmem:[#allocation7 + $0x1c] sm:$0xf]
    %v259 = vld [vmem:[#allocation7 + $0x20] sm:$0xf]
    %v260 = vld [vmem:[#allocation7 + $0x24] sm:$0xf]
    %v261 = vld [vmem:[#allocation7 + $0x28] sm:$0xf]
    %v262 = vld [vmem:[#allocation7 + $0x2c] sm:$0xf]
    %v263 = vld [vmem:[#allocation7 + $0x30] sm:$0xf]
    %v264 = vld [vmem:[#allocation7 + $0x34] sm:$0xf]
    %v265 = vld [vmem:[#allocation7 + $0x38] sm:$0xf]
    %v266 = vld [vmem:[#allocation7 + $0x3c] sm:$0xf]
    %v267 = vld [vmem:[%s4] sm:$0x1]
    %v269 = vlaneseq
    %v270 = vshrl.u32 %v269, 7
    %v271 = vsub.s32 0, %v270
    %v272 = vrot.slane %v267, %v271
    %v290 = vunpack.c.l.b16 %v251
    %v291 = vunpack.c.l.b16 %v252
    %v292 = vunpack.c.l.b16 %v253
    %v293 = vunpack.c.l.b16 %v254
    %v294 = vunpack.c.l.b16 %v255
    %v295 = vunpack.c.l.b16 %v256
    %v296 = vunpack.c.l.b16 %v257
    %v297 = vunpack.c.l.b16 %v258
    %v298 = vunpack.c.l.b16 %v259
    %v299 = vunpack.c.l.b16 %v260
    %v300 = vunpack.c.l.b16 %v261
    %v301 = vunpack.c.l.b16 %v262
    %v302 = vunpack.c.l.b16 %v263
    %v303 = vunpack.c.l.b16 %v264
    %v304 = vunpack.c.l.b16 %v265
    %v305 = vunpack.c.l.b16 %v266
    %v306 = vpack.c.b16 %v291, %v290
    %v307 = vpack.c.b16 %v293, %v292
    %v308 = vpack.c.b16 %v295, %v294
    %v309 = vpack.c.b16 %v297, %v296
    %v310 = vpack.c.b16 %v299, %v298
    %v311 = vpack.c.b16 %v301, %v300
    %v312 = vpack.c.b16 %v303, %v302
    %v313 = vpack.c.b16 %v305, %v304
    %322 = vmatprep.subr.bf16.mxu0 0
    %323 = vmatpush1.bf16.msra.mxu0 %v306
    %324 = vmatprep.subr.bf16.mxu0 0
    %325 = vmatpush1.bf16.msra.mxu0 %v307
    %326 = vmatprep.subr.bf16.mxu0 0
    %327 = vmatpush1.bf16.msra.mxu0 %v308
    %328 = vmatprep.subr.bf16.mxu0 0
    %329 = vmatpush1.bf16.msra.mxu0 %v309
    %330 = vmatprep.subr.bf16.mxu0 0
    %331 = vmatpush1.bf16.msra.mxu0 %v310
    %332 = vmatprep.subr.bf16.mxu0 0
    %333 = vmatpush1.bf16.msra.mxu0 %v311
    %334 = vmatprep.subr.bf16.mxu0 0
    %335 = vmatpush1.bf16.msra.mxu0 %v312
    %336 = vmatprep.subr.bf16.mxu0 0
    %337 = vmatpush1.bf16.msra.mxu0 %v313
    %338 = vmatprep.subr.bf16.mxu0 0
    %339 = vmatpush1.bf16.msra.mxu0 0
    %340 = vmatprep.subr.bf16.mxu0 0
    %341 = vmatpush1.bf16.msra.mxu0 0
    %342 = vmatprep.subr.bf16.mxu0 0
    %343 = vmatpush1.bf16.msra.mxu0 0
    %344 = vmatprep.subr.bf16.mxu0 0
    %345 = vmatpush1.bf16.msra.mxu0 0
    %346 = vmatprep.subr.bf16.mxu0 0
    %347 = vmatpush1.bf16.msra.mxu0 0
    %348 = vmatprep.subr.bf16.mxu0 0
    %349 = vmatpush1.bf16.msra.mxu0 0
    %350 = vmatprep.subr.bf16.mxu0 0
    %351 = vmatpush1.bf16.msra.mxu0 0
    %352 = vmatprep.subr.bf16.mxu0 0
    %353 = vmatpush1.bf16.msra.mxu0 0
    %354 = vmatprep.mubr.bf16.mxu0 0
    %355 = vmatmul.mubr.bf16.gmra.mrb[0].mxu0 %v250
    %v356 = vpop.f32.mrb[0].mxu0
    %v357 = vadd.f32 %v272, %v356
    %v358 = vpop.f32.mrb[0].mxu0
    %v359 = vpop.f32.mrb[0].mxu0
    %v360 = vpop.f32.mrb[0].mxu0
    %361 = vdwg.mxu0
    %362 = vst [vmem:[#allocation8] sm:$0xff] %v357
    // Predicated region
    $region34: #{classifier_forward.1} parent=1 // pred_check
      _
    $region35: #{classifier_forward.1} parent=1 // pred_check_branch
      %364 = sbr.rel (0) target = $region37
    $region36: #{classifier_forward.1} parent=1 // pred_region
      %s366 = ssub.s32 128, 128
      %367 = vsyncadd [#allocation4], %s366
      %s369 = sshll.u32 [#allocation8], 4
      %s370 = int_to_ptr.vmem [resolvable:$true] %s369
      %372 = dma.vmem_to_hbm [thread:$0]  %s370, 128, %s5, [#allocation4]
    $region37: #{classifier_forward.1} parent=1 // pred_fallthru
      _
    // Predicated region
    $region38: #{classifier_forward.1} parent=1 // pred_check
      _
    $region39: #{classifier_forward.1} parent=1 // pred_check_branch
      %374 = sbr.rel (0) target = $region41
    $region40: #{classifier_forward.1} parent=1 // pred_region
      %375 = dma.done [#allocation4], 128
    $region41: #{classifier_forward.1} parent=1 // pred_fallthru
      _
    %376 = vsyncpa [#allocation3], 1
    %377 = vsyncpa [#allocation6], 1
    %378 = vsyncpa [#allocation4], 1

</llo_original>
